<compile_context>
chip_gen: v5e
topology: v5e:2x2
jax: 0.10.0
libtpu: 0.0.40
codegen_flags: <defaults>
</compile_context>

<pallas_src>
import functools

import jax
import jax.numpy as jnp
from jax.experimental import pallas as pl
from jax.experimental.pallas import tpu as pltpu

_CHARB_EPS = 1e-6
_LANE = 128                         # minimum lane width for a free 2-D reshape
_TILE_BYTES = 2 * 1024 * 1024       # per-input, per-grid-step DMA target (~85%+ of HBM roofline)
_ROW_GRAIN = 64                     # block_rows granularity: multiple of the sublane tiling for
                                    # f32/bf16/int8 and of the accumulator height
_ACC_ROWS = 64                      # resident accumulator height (multi-block path)
_VMEM_LIMIT = 32 * 1024 * 1024      # scoped-VMEM request; safe on v5e/v6e (128 MiB) and v7x (64 MiB)


def _weighted_terms(d, w_mse, w_l1, w_charb):
    """w_mse*d^2 + w_l1*|d| + w_charb*sqrt(d^2+eps); disabled terms skipped statically."""
    acc = None

    def _add(a, t):
        return t if a is None else a + t

    if w_mse != 0.0:
        acc = _add(acc, jnp.float32(w_mse) * (d * d))
    if w_l1 != 0.0:
        acc = _add(acc, jnp.float32(w_l1) * jnp.abs(d))
    if w_charb != 0.0:
        acc = _add(acc, jnp.float32(w_charb) * jnp.sqrt(d * d + jnp.float32(_CHARB_EPS)))
    if acc is None:
        acc = jnp.zeros_like(d)
    return acc


def _flops_per_elem(w_mse, w_l1, w_charb):
    return 1 + (2 if w_mse else 0) + (1 if w_l1 else 0) + (3 if w_charb else 0)


# ----------------------------------------------------------------------------
# Kernels
# ----------------------------------------------------------------------------
def _reduction_kernel(x_ref, y_ref, acc_ref, *, w_mse, w_l1, w_charb,
                      steps, full_blocks, tail_rows, acc_rows, gate_needed):
    """Grid = (segments [parallel], steps [arbitrary]).

    acc_ref is the per-segment output block (acc_rows, lanes); its block index
    depends only on the segment, so Pallas keeps it resident across the step
    axis and writes it back to HBM once per segment.
    """
    s = pl.program_id(0)
    i = pl.program_id(1)

    @pl.when(i == 0)
    def _zero():
        acc_ref[...] = jnp.zeros_like(acc_ref)

    block_rows, lanes = x_ref.shape
    d = x_ref[...].astype(jnp.float32) - y_ref[...].astype(jnp.float32)
    v = _weighted_terms(d, w_mse, w_l1, w_charb)

    def _fold(t):
        # (block_rows, lanes) -> (acc_rows, lanes): sublane-group adds only
        # (major-dim split is tile-aligned; no cross-lane traffic).
        if block_rows == acc_rows:
            return t
        return t.reshape(block_rows // acc_rows, acc_rows, lanes).sum(axis=0)

    if not gate_needed:
        acc_ref[...] += _fold(v)
    else:
        b = s * steps + i               # logical block index

        @pl.when(b < full_blocks)       # fully-valid blocks: no mask
        def _full():
            acc_ref[...] += _fold(v)

        if tail_rows != block_rows:     # last real block: row-only mask
            @pl.when(b == full_blocks)
            def _tail():
                row = jax.lax.broadcasted_iota(jnp.int32, v.shape, 0)
                acc_ref[...] += _fold(jnp.where(row < tail_rows, v, 0.0))
        # b > last real block (phantom step of segment 1 when nblocks is odd):
        # contributes nothing; the clamped index_map made its DMA safe.


def _elementwise_kernel(x_ref, y_ref, o_ref, *, w_mse, w_l1, w_charb):
    """reduction='none' path: weighted per-element combination."""
    d = x_ref[...].astype(jnp.float32) - y_ref[...].astype(jnp.float32)
    o_ref[...] = _weighted_terms(d, w_mse, w_l1, w_charb).astype(o_ref.dtype)


# ----------------------------------------------------------------------------
# Wrappers
# ----------------------------------------------------------------------------
def _pick_lanes(n):
    return next(c for c in (512, 256, 128) if n % c == 0)


def _budget_rows(lanes, itemsize):
    rows = (_TILE_BYTES // (lanes * itemsize)) // _ROW_GRAIN * _ROW_GRAIN
    return max(_ROW_GRAIN, rows)


def _pallas_reduce_2d(x2, y2, w_mse, w_l1, w_charb):
    """Sum of the weighted per-element loss over a (rows, lanes) layout.

    Returns an (nseg * acc_rows, lanes) float32 array of partial sums.
    """
    rows, lanes = x2.shape
    itemsize = max(jnp.dtype(x2.dtype).itemsize, jnp.dtype(y2.dtype).itemsize)

    budget_rows = _budget_rows(lanes, itemsize)
    block_rows = rows if rows <= budget_rows else budget_rows   # full-dim block always legal

    nblocks = pl.cdiv(rows, block_rows)
    nseg = 2 if nblocks >= 2 else 1          # always split across both v7x TensorCores
    steps = pl.cdiv(nblocks, nseg)

    acc_rows = block_rows if block_rows <= _ACC_ROWS else _ACC_ROWS
    assert block_rows % acc_rows == 0        # by construction (budget_rows % 64 == 0)

    tail_rows = rows - (nblocks - 1) * block_rows        # valid rows of the last real block
    has_phantom = nseg * steps > nblocks                 # odd nblocks with nseg == 2
    gate_needed = (tail_rows != block_rows) or has_phantom
    full_blocks = nblocks - 1 if tail_rows != block_rows else nblocks

    kernel = functools.partial(
        _reduction_kernel, w_mse=w_mse, w_l1=w_l1, w_charb=w_charb,
        steps=steps, full_blocks=full_blocks, tail_rows=tail_rows,
        acc_rows=acc_rows, gate_needed=gate_needed)

    if has_phantom:
        def in_idx(s, i):
            return (jnp.minimum(s * steps + i, nblocks - 1), 0)
    else:
        def in_idx(s, i):
            return (s * steps + i, 0)
    in_spec = pl.BlockSpec((block_rows, lanes), in_idx)

    n_main = rows * lanes
    cost = pl.CostEstimate(
        flops=_flops_per_elem(w_mse, w_l1, w_charb) * n_main,
        transcendentals=n_main if w_charb else 0,
        bytes_accessed=n_main * 2 * itemsize)

    return pl.pallas_call(
        kernel,
        out_shape=jax.ShapeDtypeStruct((nseg * acc_rows, lanes), jnp.float32),
        grid=(nseg, steps),
        in_specs=[in_spec, in_spec],
        out_specs=pl.BlockSpec((acc_rows, lanes), lambda s, i: (s, 0)),
        compiler_params=pltpu.CompilerParams(
            dimension_semantics=("parallel", "arbitrary"),
            vmem_limit_bytes=_VMEM_LIMIT),
        cost_estimate=cost,
    )(x2, y2)


def _reduced_loss(x, y, w_mse, w_l1, w_charb, reduction):
    n = x.size
    xf = x.reshape(-1)
    yf = y.reshape(-1)

    # < 128 trailing elements that don't fit a lane-dense layout: plain jnp
    # (negligible work, avoids the old jnp.pad extra HBM passes + element-mask).
    main_n = (n // _LANE) * _LANE
    tail_sum = jnp.float32(0.0)
    if main_n != n:
        dt = xf[main_n:].astype(jnp.float32) - yf[main_n:].astype(jnp.float32)
        tail_sum = jnp.sum(_weighted_terms(dt, w_mse, w_l1, w_charb))

    if main_n == 0:
        total = tail_sum
    else:
        xm = xf if main_n == n else xf[:main_n]
        ym = yf if main_n == n else yf[:main_n]
        lanes = _pick_lanes(main_n)
        rows = main_n // lanes
        partials = _pallas_reduce_2d(xm.reshape(rows, lanes), ym.reshape(rows, lanes),
                                     w_mse, w_l1, w_charb)
        total = jnp.sum(partials) + tail_sum

    if reduction == 'mean':
        total = total / jnp.float32(n)
    return total


def _elementwise_loss(x, y, w_mse, w_l1, w_charb):
    out_dtype = jnp.promote_types(x.dtype, y.dtype)
    if not jnp.issubdtype(out_dtype, jnp.floating):
        out_dtype = jnp.float32

    n = x.size
    xf = x.reshape(-1)
    yf = y.reshape(-1)
    main_n = (n // _LANE) * _LANE

    pieces = []
    if main_n:
        xm = xf if main_n == n else xf[:main_n]
        ym = yf if main_n == n else yf[:main_n]
        lanes = _pick_lanes(main_n)
        rows = main_n // lanes
        itemsize = max(jnp.dtype(x.dtype).itemsize, jnp.dtype(y.dtype).itemsize,
                       jnp.dtype(out_dtype).itemsize)
        budget_rows = _budget_rows(lanes, itemsize)
        block_rows = rows if rows <= budget_rows else budget_rows
        nblocks = pl.cdiv(rows, block_rows)

        kernel = functools.partial(
            _elementwise_kernel, w_mse=w_mse, w_l1=w_l1, w_charb=w_charb)
        spec = pl.BlockSpec((block_rows, lanes), lambda i: (i, 0))
        cost = pl.CostEstimate(
            flops=_flops_per_elem(w_mse, w_l1, w_charb) * main_n,
            transcendentals=main_n if w_charb else 0,
            bytes_accessed=main_n * (jnp.dtype(x.dtype).itemsize
                                     + jnp.dtype(y.dtype).itemsize
                                     + jnp.dtype(out_dtype).itemsize))

        out2 = pl.pallas_call(
            kernel,
            out_shape=jax.ShapeDtypeStruct((rows, lanes), out_dtype),
            grid=(nblocks,),
            in_specs=[spec, spec],
            out_specs=spec,
            compiler_params=pltpu.CompilerParams(
                dimension_semantics=("parallel",),
                vmem_limit_bytes=_VMEM_LIMIT),
            cost_estimate=cost,
        )(xm.reshape(rows, lanes), ym.reshape(rows, lanes))
        pieces.append(out2.reshape(-1))

    if main_n != n:
        dt = xf[main_n:].astype(jnp.float32) - yf[main_n:].astype(jnp.float32)
        pieces.append(_weighted_terms(dt, w_mse, w_l1, w_charb).astype(out_dtype))

    flat = pieces[0] if len(pieces) == 1 else jnp.concatenate(pieces)
    return flat.reshape(x.shape)


class FlexibleLoss:
    """JAX / Pallas port of the PyTorch FlexibleLoss module (forward only)."""

    _SUPPORTED = ('mse', 'l1', 'charbonnier')
    _REDUCTIONS = ('mean', 'sum', 'none')

    def __init__(self, mode='mse', alpha=0.5, beta=1.0, gamma=0.1, delta=0.1,
                 reduction='mean'):
        # alpha / gamma / delta only weight the ssim / gradient / tv components,
        # whose helper functions are undefined in the source module (see TODO).
        self.mode = mode.split('+')
        self.alpha = alpha
        self.beta = beta
        self.gamma = gamma
        self.delta = delta
        self.reduction = reduction

    def __call__(self, x, y):
        unsupported = [m for m in self.mode if m not in self._SUPPORTED]
        if unsupported:
            # TODO(synk): ssim_loss / ms_ssim_loss / gradient_loss / tv_loss are
            # referenced but never defined in the source module; no faithful
            # implementation is possible from the given code.
            raise NotImplementedError(f'Unknown/undefined loss modes: {unsupported}')
        if self.reduction not in self._REDUCTIONS:
            raise ValueError(f'{self.reduction!r} is not a valid value for reduction')

        w_mse = w_l1 = w_charb = 0.0
        for m in self.mode:
            if m == 'mse':
                w_mse += self.beta
            elif m == 'l1':
                w_l1 += self.beta
            elif m == 'charbonnier':
                w_charb += self.beta

        if self.reduction == 'none':
            return _elementwise_loss(x, y, w_mse, w_l1, w_charb)
        return _reduced_loss(x, y, w_mse, w_l1, w_charb, self.reduction)


# ----------------------------------------------------------------------------
# Demo / self-check
# ----------------------------------------------------------------------------
if __name__ == "__main__":
    key = jax.random.PRNGKey(0)
    k = jax.random.split(key, 6)
    x = jax.random.normal(k[0], (2, 4, 16, 16), dtype=jnp.float32)
    y = jax.random.normal(k[1], (2, 4, 16, 16), dtype=jnp.float32)

    # default module config: mode='mse', reduction='mean'
    out = jax.block_until_ready(FlexibleLoss(mode='mse', beta=1.0, reduction='mean')(x, y))
    ref = jnp.mean((x - y) ** 2)
    assert jnp.allclose(out, ref, rtol=1e-5, atol=1e-6), (out, ref)

    # combined mode, mean reduction
    out2 = jax.block_until_ready(
        FlexibleLoss(mode='mse+l1+charbonnier', beta=1.0, reduction='mean')(x, y))
    ref2 = (jnp.mean((x - y) ** 2) + jnp.mean(jnp.abs(x - y))
            + jnp.mean(jnp.sqrt((x - y) ** 2 + 1e-6)))
    assert jnp.allclose(out2, ref2, rtol=1e-5, atol=1e-5), (out2, ref2)

    # reduction='none' elementwise path
    out3 = jax.block_until_ready(
        FlexibleLoss(mode='l1+charbonnier', beta=1.0, reduction='none')(x, y))
    ref3 = jnp.abs(x - y) + jnp.sqrt((x - y) ** 2 + 1e-6)
    assert out3.shape == x.shape
    assert jnp.allclose(out3, ref3, rtol=1e-5, atol=1e-5)

    # odd (non-128-divisible) shape exercises the jnp tail + small-block path
    x4 = jax.random.normal(k[2], (2, 3, 15, 17), dtype=jnp.float32)
    y4 = jax.random.normal(k[3], (2, 3, 15, 17), dtype=jnp.float32)
    out4 = jax.block_until_ready(
        FlexibleLoss(mode='charbonnier', beta=1.0, reduction='sum')(x4, y4))
    ref4 = jnp.sum(jnp.sqrt((x4 - y4) ** 2 + 1e-6))
    assert jnp.allclose(out4, ref4, rtol=1e-5, atol=1e-4), (out4, ref4)

    # multi-block shape: exercises the 2-segment (megacore) split, the
    # partial-tail row mask and the odd-nblocks phantom step in the kernel
    x5 = jax.random.normal(k[4], (2, 4, 512, 257), dtype=jnp.float32)
    y5 = jax.random.normal(k[5], (2, 4, 512, 257), dtype=jnp.float32)
    out5 = jax.block_until_ready(
        FlexibleLoss(mode='mse+l1', beta=1.0, reduction='mean')(x5, y5))
    ref5 = jnp.mean((x5 - y5) ** 2) + jnp.mean(jnp.abs(x5 - y5))
    assert jnp.allclose(out5, ref5, rtol=1e-4, atol=1e-4), (out5, ref5)

    print("KERNEL_OK")
</pallas_src>

<mosaic_0001>
module attributes {stable_mosaic.version = 11 : i64} {
  func.func @_reduction_kernel(%arg0: i32, %arg1: i32, %arg2: memref<4x512xf32, #tpu.memory_space<vmem>>, %arg3: memref<4x512xf32, #tpu.memory_space<vmem>>, %arg4: memref<4x512xf32, #tpu.memory_space<vmem>>) attributes {dimension_semantics = [#tpu.dimension_semantics<parallel>, #tpu.dimension_semantics<arbitrary>], iteration_bounds = array<i64: 1, 1>, scalar_prefetch = 0 : i64, scratch_operands = 0 : i64, tpu.core_type = #tpu.core_type<tc>, window_params = [{transform_indices = @transform_0, window_bounds = array<i64: 4, 512>}, {transform_indices = @transform_1, window_bounds = array<i64: 4, 512>}, {transform_indices = @transform_2, window_bounds = array<i64: 4, 512>}]} {
    %c0_i32 = arith.constant 0 : i32
    %0 = arith.cmpi eq, %arg1, %c0_i32 : i32
    %1 = arith.extui %0 : i1 to i32
    %c0_i32_0 = arith.constant 0 : i32
    %2 = arith.cmpi ne, %1, %c0_i32_0 : i32
    scf.if %2 {
      %cst_8 = arith.constant 0.000000e+00 : f32
      %12 = vector.broadcast %cst_8 : f32 to vector<4x512xf32>
      %c0_9 = arith.constant 0 : index
      %c0_10 = arith.constant 0 : index
      %13 = vector.load %arg4[%c0_9, %c0_10] : memref<4x512xf32, #tpu.memory_space<vmem>>, vector<4x512xf32>
      tpu.vector_store %arg4[%c0_9, %c0_10], %12 {strides = array<i32>} : memref<4x512xf32, #tpu.memory_space<vmem>>, vector<4x512xf32>,
    } else {
    }
    %c0 = arith.constant 0 : index
    %c0_1 = arith.constant 0 : index
    %3 = vector.load %arg2[%c0, %c0_1] : memref<4x512xf32, #tpu.memory_space<vmem>>, vector<4x512xf32>
    %c0_2 = arith.constant 0 : index
    %c0_3 = arith.constant 0 : index
    %4 = vector.load %arg3[%c0_2, %c0_3] : memref<4x512xf32, #tpu.memory_space<vmem>>, vector<4x512xf32>
    %5 = arith.subf %3, %4 : vector<4x512xf32>
    %6 = arith.mulf %5, %5 : vector<4x512xf32>
    %cst = arith.constant 1.000000e+00 : f32
    %7 = vector.broadcast %cst : f32 to vector<4x512xf32>
    %8 = arith.mulf %7, %6 : vector<4x512xf32>
    %c0_4 = arith.constant 0 : index
    %c0_5 = arith.constant 0 : index
    %9 = vector.load %arg4[%c0_4, %c0_5] : memref<4x512xf32, #tpu.memory_space<vmem>>, vector<4x512xf32>
    %10 = arith.addf %9, %8 : vector<4x512xf32>
    %c0_6 = arith.constant 0 : index
    %c0_7 = arith.constant 0 : index
    %11 = vector.load %arg4[%c0_6, %c0_7] : memref<4x512xf32, #tpu.memory_space<vmem>>, vector<4x512xf32>
    tpu.vector_store %arg4[%c0_6, %c0_7], %10 {strides = array<i32>} : memref<4x512xf32, #tpu.memory_space<vmem>>, vector<4x512xf32>,
    return
  }
  func.func @transform_0(%arg0: i32, %arg1: i32) -> (i32, i32) {
    %c1_i32 = arith.constant 1 : i32
    %0 = arith.muli %arg0, %c1_i32 : i32
    %1 = arith.addi %0, %arg1 : i32
    %c0_i32 = arith.constant 0 : i32
    %c0_i32_0 = arith.constant 0 : i32
    return %1, %c0_i32 : i32, i32
  }
  func.func @transform_1(%arg0: i32, %arg1: i32) -> (i32, i32) {
    %c1_i32 = arith.constant 1 : i32
    %0 = arith.muli %arg0, %c1_i32 : i32
    %1 = arith.addi %0, %arg1 : i32
    %c0_i32 = arith.constant 0 : i32
    %c0_i32_0 = arith.constant 0 : i32
    return %1, %c0_i32 : i32, i32
  }
  func.func @transform_2(%arg0: i32, %arg1: i32) -> (i32, i32) {
    %c0_i32 = arith.constant 0 : i32
    %c0_i32_0 = arith.constant 0 : i32
    return %arg0, %c0_i32 : i32, i32
  }
}

</mosaic_0001>

<llo_original>
// kernel: tpu_custom_call.1
$region0: #{tpu_custom_call.1}
  #allocation0 [shape = 'u32[]', space=smem, size = 0x4, offset = 0x4, fixed_abs, tag = 'smem constant byte address 0x4 - core index']
  #allocation1 [shape = 'u32[72,128]{1,0:T(1,128)}', space=vmem, size = 0x9000, scoped, tag = 'internal scratch']
  %s0 = inlined_call_operand.hbm [shape: f32[4,512], index: 0, kind: input, shape index: {}]
  %s1 = inlined_call_operand.hbm [shape: f32[4,512], index: 1, kind: input, shape index: {}]
  %s2 = inlined_call_operand.hbm [shape: f32[4,512], index: 2, kind: output, shape index: {}]
  %s3 = sld [smem:[#allocation0]]
  $region30: #{tpu_custom_call.1} parent=0
    _
  %s5 = ssub.s32 1, %s3
  %s6 = scalar_select 0, %s5, %s3
  $region1: #{tpu_custom_call.1} parent=0
    #allocation2 [shape = 'u8[8192]{0}', space=vmem, size = 0x2000, scoped, tag = 'input window, operand 0, single buffered']
    #allocation3 [shape = 's32[1]{0}', space=sflag, size = 0x4, scoped, tag = 'scoped memory for tpu_custom_call.1']
    #allocation4 [shape = 's32[1]{0}', space=sflag, size = 0x4, scoped, tag = 'scoped memory for tpu_custom_call.1']
    #allocation5 [shape = 'u8[8192]{0}', space=vmem, size = 0x2000, scoped, tag = 'input window, operand 1, single buffered']
    #allocation6 [shape = 's32[1]{0}', space=sflag, size = 0x4, scoped, tag = 'scoped memory for tpu_custom_call.1']
    #allocation7 [shape = 'u8[8192]{0}', space=vmem, size = 0x2000, scoped, tag = 'output window, operand 0, single buffered']
    %7 = vsyncpa [#allocation3], 0
    %8 = vsyncpa [#allocation6], 0
    %9 = vsyncpa [#allocation4], 0
    // Predicated region
    $region2: #{tpu_custom_call.1} parent=1 // pred_check
      _
    $region3: #{tpu_custom_call.1} parent=1 // pred_check_branch
      %11 = sbr.rel (0) target = $region5
    $region4: #{tpu_custom_call.1} parent=1 // pred_region
      %s12 = sadd.s32 0, 0
      %14 = vsyncadd [#allocation3], 0
      %s15 = smul.addr %s12, 4
      %s16 = smul.addr %s15, 4
      %s17 = scalar_lea.hbm %s0, %s16
      %s19 = sshll.u32 %s17, 4
      %s20 = int_to_ptr.hbm [resolvable:$true] %s19
      %s21 = sshll.u32 [#allocation2], 4
      %s22 = int_to_ptr.vmem [resolvable:$true] %s21
      %24 = dma.hbm_to_vmem [thread:$0]  %s20, 256, %s22, [#allocation3]
    $region5: #{tpu_custom_call.1} parent=1 // pred_fallthru
      _
    // Predicated region
    $region6: #{tpu_custom_call.1} parent=1 // pred_check
      _
    $region7: #{tpu_custom_call.1} parent=1 // pred_check_branch
      %26 = sbr.rel (0) target = $region9
    $region8: #{tpu_custom_call.1} parent=1 // pred_region
      %s27 = sadd.s32 0, 0
      %29 = vsyncadd [#allocation6], 0
      %s30 = smul.addr %s27, 4
      %s31 = smul.addr %s30, 4
      %s32 = scalar_lea.hbm %s1, %s31
      %s34 = sshll.u32 %s32, 4
      %s35 = int_to_ptr.hbm [resolvable:$true] %s34
      %s36 = sshll.u32 [#allocation5], 4
      %s37 = int_to_ptr.vmem [resolvable:$true] %s36
      %39 = dma.hbm_to_vmem [thread:$0]  %s35, 256, %s37, [#allocation6]
    $region9: #{tpu_custom_call.1} parent=1 // pred_fallthru
      _
    // Predicated region
    $region10: #{tpu_custom_call.1} parent=1 // pred_check
      _
    $region11: #{tpu_custom_call.1} parent=1 // pred_check_branch
      %41 = sbr.rel (0) target = $region13
    $region12: #{tpu_custom_call.1} parent=1 // pred_region
      %43 = dma.done [#allocation3], 256
    $region13: #{tpu_custom_call.1} parent=1 // pred_fallthru
      _
    // Predicated region
    $region14: #{tpu_custom_call.1} parent=1 // pred_check
      _
    $region15: #{tpu_custom_call.1} parent=1 // pred_check_branch
      %45 = sbr.rel (0) target = $region17
    $region16: #{tpu_custom_call.1} parent=1 // pred_region
      %47 = dma.done [#allocation6], 256
    $region17: #{tpu_custom_call.1} parent=1 // pred_fallthru
      _
    %s48 = sadd.s32 0, 0
    %s49 = sadd.s32 0, 0
    %p50 = scmp.eq.s32.totalorder 0, 0
    // Predicated region
    $region18: #{tpu_custom_call.1} parent=1 // pred_check
      %p51 = pneg %p50
    $region19: #{tpu_custom_call.1} parent=1 // pred_check_branch
      %53 = sbr.rel (%p51) target = $region21
    $region20: #{tpu_custom_call.1} parent=1 // pred_region
      %54 = vst [vmem:[#allocation7] sm:$0xff] 0.0
      %55 = vst [vmem:[#allocation7 + $0x8] sm:$0xff] 0.0
    $region21: #{tpu_custom_call.1} parent=1 // pred_fallthru
      _
    %v56 = vld [vmem:[#allocation2] sm:$0xff]
    %v57 = vld [vmem:[#allocation2 + $0x8] sm:$0xff]
    %v58 = vld [vmem:[#allocation5] sm:$0xff]
    %v59 = vld [vmem:[#allocation5 + $0x8] sm:$0xff]
    %v60 = vsub.f32 %v56, %v58
    %v61 = vsub.f32 %v57, %v59
    %v62 = vmul.f32 %v60, %v60
    %v63 = vmul.f32 %v61, %v61
    %v64 = vld [vmem:[#allocation7] sm:$0xff]
    %v65 = vld [vmem:[#allocation7 + $0x8] sm:$0xff]
    %v66 = vadd.f32 %v64, %v62
    %v67 = vadd.f32 %v65, %v63
    %68 = vst [vmem:[#allocation7] sm:$0xff] %v66
    %69 = vst [vmem:[#allocation7 + $0x8] sm:$0xff] %v67
    // Predicated region
    $region22: #{tpu_custom_call.1} parent=1 // pred_check
      _
    $region23: #{tpu_custom_call.1} parent=1 // pred_check_branch
      %71 = sbr.rel (0) target = $region25
    $region24: #{tpu_custom_call.1} parent=1 // pred_region
      %73 = vsyncadd [#allocation4], 0
      %s75 = sshll.u32 [#allocation7], 4
      %s76 = int_to_ptr.vmem [resolvable:$true] %s75
      %s77 = sshll.u32 %s2, 4
      %s78 = int_to_ptr.hbm [resolvable:$true] %s77
      %80 = dma.vmem_to_hbm [thread:$0]  %s76, 256, %s78, [#allocation4]
    $region25: #{tpu_custom_call.1} parent=1 // pred_fallthru
      _
    // Predicated region
    $region26: #{tpu_custom_call.1} parent=1 // pred_check
      _
    $region27: #{tpu_custom_call.1} parent=1 // pred_check_branch
      %82 = sbr.rel (0) target = $region29
    $region28: #{tpu_custom_call.1} parent=1 // pred_region
      %84 = dma.done [#allocation4], 256
    $region29: #{tpu_custom_call.1} parent=1 // pred_fallthru
      _
    %85 = vsyncpa [#allocation3], 1
    %86 = vsyncpa [#allocation6], 1
    %87 = vsyncpa [#allocation4], 1

</llo_original>
